<compile_context>
chip_gen: v7x
topology: tpu7x:2x2x1
jax: 0.10.0
libtpu: 0.0.40
codegen_flags: <defaults>
</compile_context>

<pallas_src>
import jax
import jax.numpy as jnp
from jax.experimental import pallas as pl
from jax.experimental.pallas import tpu as pltpu


# ----------------------- toy config (correctness only) -----------------------
BATCH = 2
CHANNELS = 3
IMAGE = 16
PATCH = 4
HIDDEN = 128                               # lane-dense: multiple of 128
GRID_HW = IMAGE // PATCH                   # 4
NUM_PATCHES = GRID_HW * GRID_HW            # 16  (== num_positions)
PATCH_DIM = CHANNELS * PATCH * PATCH       # 48  (im2col K)
PARAM_DTYPE = jnp.float32
COMPUTE_DTYPE = jnp.bfloat16               # MXU input dtype (f32 accumulation)


# ------------------------------ Pallas kernel ------------------------------
def _embeddings_kernel(x_ref, w_ref, pos_ref, o_ref):
    """(TM, K) @ (K, D) in compute dtype on the MXU, f32 accumulation;
    position(+bias) add stays in the f32 accumulator; single cast at store."""
    y = jnp.dot(x_ref[0], w_ref[...], preferred_element_type=jnp.float32)  # (TM, D)
    y = y + pos_ref[...]                                                   # f32 add (VPU)
    o_ref[0] = y.astype(o_ref.dtype)


# --------------------------- one-time param prep ---------------------------
def prepare_params(conv_weight, conv_bias, pos_embedding,
                   *, compute_dtype=COMPUTE_DTYPE):
    """Do this at model-load time (amortized), NOT per forward call."""
    D, C, P, _ = conv_weight.shape
    K = C * P * P
    w_kd = conv_weight.reshape(D, K).T.astype(compute_dtype)          # (K, D)
    # Fold conv bias into the position table; keep it f32 so the in-kernel add
    # happens against the f32 accumulator (no double rounding).
    pos_plus_bias = (pos_embedding.astype(jnp.float32)
                     + conv_bias.astype(jnp.float32)[None, :])         # (S, D)
    return w_kd, pos_plus_bias


def _pick_seq_tile(num_patches: int, target: int) -> int:
    """Largest multiple of 8 <= target that divides num_patches (else full)."""
    if num_patches <= target:
        return num_patches
    for tm in range(target, 7, -8):
        if num_patches % tm == 0:
            return tm
    return num_patches


# ---------------------------------- forward ----------------------------------
def siglip2_vision_embeddings(
    pixel_values,            # (B, C, H, W)
    w_kd,                    # (K, D)  prepared weight, compute dtype
    pos_plus_bias,           # (num_positions, D) f32, conv bias folded in
    *,
    patch_size: int,
    out_dtype=jnp.float32,
    seq_tile: int = 512,     # ~512 keeps double-buffered VMEM < 32 MiB on v7x;
                             # sweep up to 1024-2048 on v6e/v5e (128 MiB VMEM)
    interpolate_pos_encoding: bool = False,
):
    if interpolate_pos_encoding:
        # TODO(synk): bicubic interpolation of the position table (NaFlex /
        # variable-resolution path) has no clean Pallas equivalent here.
        raise NotImplementedError("interpolate_pos_encoding not supported")

    B, C, H, W = pixel_values.shape
    P = patch_size
    gh, gw = H // P, W // P
    S = gh * gw
    K, D = w_kd.shape
    assert K == C * P * P and S == pos_plus_bias.shape[0]

    # im2col (layout plumbing only): (B,C,H,W) -> (B, S, C*P*P), patch vector
    # ordered (C, Ph, Pw) to match the Conv2d weight reshape.  Cast to the
    # compute dtype first so the reshape moves half the bytes.
    # TODO(synk): if end-to-end profiling shows this extra HBM pass matters,
    # emit patch-major pixels upstream or gather patches inside the pipeline.
    x = pixel_values.astype(w_kd.dtype)
    x = x.reshape(B, C, gh, P, gw, P)
    x = x.transpose(0, 2, 4, 1, 3, 5)
    x = x.reshape(B, S, K)

    tm = _pick_seq_tile(S, seq_tile)

    return pl.pallas_call(
        _embeddings_kernel,
        out_shape=jax.ShapeDtypeStruct((B, S, D), out_dtype),
        grid_spec=pltpu.PrefetchScalarGridSpec(
            num_scalar_prefetch=0,
            # Sequence tile OUTER, batch INNER: weight + pos block indices are
            # constant across the inner axis -> no re-DMA of w / pos tiles.
            grid=(S // tm, B),
            in_specs=[
                pl.BlockSpec((1, tm, K), lambda s, b: (b, s, 0)),
                pl.BlockSpec((K, D), lambda s, b: (0, 0)),
                pl.BlockSpec((tm, D), lambda s, b: (s, 0)),
            ],
            out_specs=pl.BlockSpec((1, tm, D), lambda s, b: (b, s, 0)),
        ),
        compiler_params=pltpu.CompilerParams(
            dimension_semantics=("parallel", "parallel"),  # both TCs busy on v7x
        ),
    )(x, w_kd, pos_plus_bias)


# --------------------------- pure-JAX reference ---------------------------
def _ref_forward(pixel_values, conv_weight, conv_bias, pos_embedding,
                 patch_size, compute_dtype):
    x = pixel_values.astype(compute_dtype)
    w = conv_weight.astype(compute_dtype)
    out = jax.lax.conv_general_dilated(
        x, w,
        window_strides=(patch_size, patch_size),
        padding="VALID",
        dimension_numbers=("NCHW", "OIHW", "NCHW"),
        preferred_element_type=jnp.float32,
    )
    out = out + conv_bias.astype(jnp.float32)[None, :, None, None]   # (B, D, gh, gw)
    B, D, gh, gw = out.shape
    emb = out.reshape(B, D, gh * gw).transpose(0, 2, 1)              # flatten(2).T
    return emb + pos_embedding.astype(jnp.float32)[None]             # + pos table


# -------------------------------- params init --------------------------------
def init_params(key):
    k_w, k_b, k_pos = jax.random.split(key, 3)
    std = 0.02
    conv_weight = (jax.random.normal(k_w, (HIDDEN, CHANNELS, PATCH, PATCH)) * std
                   ).astype(PARAM_DTYPE)
    conv_bias = (jax.random.normal(k_b, (HIDDEN,)) * std).astype(PARAM_DTYPE)
    pos_embedding = (jax.random.normal(k_pos, (NUM_PATCHES, HIDDEN)) * std
                     ).astype(PARAM_DTYPE)
    return conv_weight, conv_bias, pos_embedding


if __name__ == "__main__":
    root = jax.random.PRNGKey(0)
    k_x, k_p = jax.random.split(root)

    pixel_values = jax.random.normal(k_x, (BATCH, CHANNELS, IMAGE, IMAGE), PARAM_DTYPE)
    conv_weight, conv_bias, pos_embedding = init_params(k_p)

    # One-time parameter preparation (weight reshape + bias folding).
    w_kd, pos_plus_bias = prepare_params(conv_weight, conv_bias, pos_embedding)

    out = siglip2_vision_embeddings(
        pixel_values, w_kd, pos_plus_bias,
        patch_size=PATCH, out_dtype=jnp.float32,
    )
    out = jax.block_until_ready(out)

    ref = _ref_forward(pixel_values, conv_weight, conv_bias, pos_embedding,
                       PATCH, COMPUTE_DTYPE)
    assert out.shape == (BATCH, NUM_PATCHES, HIDDEN)
    assert jnp.allclose(out, ref, atol=1e-3, rtol=1e-3), "mismatch vs reference"

    print("KERNEL_OK")
</pallas_src>

<mosaic_0001>
module attributes {stable_mosaic.version = 11 : i64} {
  func.func @_embeddings_kernel(%arg0: i32, %arg1: i32, %arg2: memref<1x16x48xbf16, #tpu.memory_space<vmem>>, %arg3: memref<48x128xbf16, #tpu.memory_space<vmem>>, %arg4: memref<16x128xf32, #tpu.memory_space<vmem>>, %arg5: memref<1x16x128xf32, #tpu.memory_space<vmem>>) attributes {dimension_semantics = [#tpu.dimension_semantics<parallel>, #tpu.dimension_semantics<parallel>], iteration_bounds = array<i64: 1, 2>, scalar_prefetch = 0 : i64, scratch_operands = 0 : i64, tpu.core_type = #tpu.core_type<tc>, window_params = [{transform_indices = @transform_0, window_bounds = array<i64: 1, 16, 48>}, {pipeline_mode = #tpu.pipeline_mode<synchronous>, transform_indices = @transform_1, window_bounds = array<i64: 48, 128>}, {transform_indices = @transform_2, window_bounds = array<i64: 16, 128>}, {transform_indices = @transform_3, window_bounds = array<i64: 1, 16, 128>}]} {
    %c0 = arith.constant 0 : index
    %c0_0 = arith.constant 0 : index
    %c0_1 = arith.constant 0 : index
    %0 = vector.load %arg2[%c0, %c0_0, %c0_1] : memref<1x16x48xbf16, #tpu.memory_space<vmem>>, vector<1x16x48xbf16>
    %1 = vector.shape_cast %0 : vector<1x16x48xbf16> to vector<16x48xbf16>
    %c0_2 = arith.constant 0 : index
    %c0_3 = arith.constant 0 : index
    %2 = vector.load %arg3[%c0_2, %c0_3] : memref<48x128xbf16, #tpu.memory_space<vmem>>, vector<48x128xbf16>
    %cst = arith.constant dense<0.000000e+00> : vector<16x128xf32>
    %3 = tpu.matmul %1, %2, %cst {dimension_numbers = #tpu.dot_dimension_numbers<[1], [0], [0], [1], [0, 0, 1, 1], [], []>} : vector<16x48xbf16>, vector<48x128xbf16>, vector<16x128xf32> -> vector<16x128xf32>
    %c0_4 = arith.constant 0 : index
    %c0_5 = arith.constant 0 : index
    %4 = vector.load %arg4[%c0_4, %c0_5] : memref<16x128xf32, #tpu.memory_space<vmem>>, vector<16x128xf32>
    %5 = arith.addf %3, %4 : vector<16x128xf32>
    %c0_6 = arith.constant 0 : index
    %c0_7 = arith.constant 0 : index
    %c0_8 = arith.constant 0 : index
    %6 = vector.load %arg5[%c0_6, %c0_7, %c0_8] : memref<1x16x128xf32, #tpu.memory_space<vmem>>, vector<1x16x128xf32>
    %7 = vector.shape_cast %6 : vector<1x16x128xf32> to vector<16x128xf32>
    %8 = vector.shape_cast %5 : vector<16x128xf32> to vector<1x16x128xf32>
    tpu.vector_store %arg5[%c0_6, %c0_7, %c0_8], %8 {strides = array<i32>} : memref<1x16x128xf32, #tpu.memory_space<vmem>>, vector<1x16x128xf32>,
    return
  }
  func.func @transform_0(%arg0: i32, %arg1: i32) -> (i32, i32, i32) {
    %c0_i32 = arith.constant 0 : i32
    %c0_i32_0 = arith.constant 0 : i32
    return %arg1, %arg0, %c0_i32 : i32, i32, i32
  }
  func.func @transform_1(%arg0: i32, %arg1: i32) -> (i32, i32) {
    %c0_i32 = arith.constant 0 : i32
    %c0_i32_0 = arith.constant 0 : i32
    %c0_i32_1 = arith.constant 0 : i32
    return %c0_i32, %c0_i32_0 : i32, i32
  }
  func.func @transform_2(%arg0: i32, %arg1: i32) -> (i32, i32) {
    %c0_i32 = arith.constant 0 : i32
    %c0_i32_0 = arith.constant 0 : i32
    return %arg0, %c0_i32 : i32, i32
  }
  func.func @transform_3(%arg0: i32, %arg1: i32) -> (i32, i32, i32) {
    %c0_i32 = arith.constant 0 : i32
    %c0_i32_0 = arith.constant 0 : i32
    return %arg1, %arg0, %c0_i32 : i32, i32, i32
  }
}

</mosaic_0001>

<llo_original>
// kernel: tpu_custom_call.1
$region0: #{tpu_custom_call.1}
  #allocation0 [shape = 'u32[]', space=smem, size = 0x4, offset = 0x4, fixed_abs, tag = 'smem constant byte address 0x4 - core index']
  #allocation1 [shape = 'u32[144,128]{1,0:T(1,128)}', space=vmem, size = 0x12000, scoped, tag = 'internal scratch']
  %s0 = inlined_call_operand.hbm [shape: bf16[2,16,48], index: 0, kind: input, shape index: {}]
  %s1 = inlined_call_operand.hbm [shape: bf16[48,128], index: 1, kind: input, shape index: {}]
  %s2 = inlined_call_operand.hbm [shape: f32[16,128], index: 2, kind: input, shape index: {}]
  %s3 = inlined_call_operand.hbm [shape: f32[2,16,128], index: 3, kind: output, shape index: {}]
  %s4 = sld [smem:[#allocation0]]
  $region57: #{tpu_custom_call.1} parent=0
    _
  %s6 = ssub.s32 1, %s4
  %s7 = scalar_select 0, %s6, %s4
  $region1: #{tpu_custom_call.1} parent=0
    #allocation2 [shape = 'u8[8192]{0}', space=vmem, size = 0x2000, scoped, tag = 'input window, operand 0']
    #allocation3 [shape = 's32[2]{0}', space=sflag, size = 0x8, scoped, tag = 'scoped memory for tpu_custom_call.1']
    #allocation4 [shape = 's32[2]{0}', space=sflag, size = 0x8, scoped, tag = 'scoped memory for tpu_custom_call.1']
    #allocation5 [shape = 'u8[12288]{0}', space=vmem, size = 0x3000, scoped, tag = 'input window, operand 1, single buffered']
    #allocation6 [shape = 's32[1]{0}', space=sflag, size = 0x4, scoped, tag = 'scoped memory for tpu_custom_call.1']
    #allocation7 [shape = 'u8[8192]{0}', space=vmem, size = 0x2000, scoped, tag = 'input window, operand 2, single buffered']
    #allocation8 [shape = 'u8[16384]{0}', space=vmem, size = 0x4000, scoped, tag = 'output window, operand 0']
    %8 = vsyncpa [#allocation3], 0
    %s9 = scalar_lea.sflag [#allocation3], 1
    %10 = vsyncpa %s9, 0
    %11 = vsyncpa [#allocation6], 0
    %12 = vsyncpa [#allocation4], 0
    %s13 = scalar_lea.sflag [#allocation4], 1
    %14 = vsyncpa %s13, 0
    loop: start=0, step=1, limit=4
    $region2: #{tpu_custom_call.1} parent=1 // loop_pre_header
      _
    $region3: #{tpu_custom_call.1} parent=1 // loop_header
      %s16 = sphi 0, %s20
      %p17 = scmp.ge.s32.totalorder %s16, 4
      %s23 = sphi 0, %s35
      %s24 = sphi 0, %s31
      %s25 = sphi 0, %s23
      %s26 = sphi 0, %s24
      %s27 = sphi 0, %s25
      %s28 = sphi 0, %s26
      %s40 = sphi 0, %s42
      %s43 = sphi 0, %s40
      %s44 = sphi 0, %s43
      %s60 = sphi 0, %s44
      %s64 = sphi 0, %s64
      %s66 = sphi 0, %s64
      %s67 = sphi 0, %s66
      %s81 = sphi 0, %s67
      %s87 = sphi 0, %s89
      %s90 = sphi 0, %s87
      %s91 = sphi 0, %s90
      %s107 = sphi 0, %s91
      %s115 = sphi 0, %s117
      %s118 = sphi 0, %s115
      %s119 = sphi 0, %s118
      %s135 = sphi 0, %s119
    $region4: #{tpu_custom_call.1} parent=1 // loop_header_branch
      %19 = sbr.rel (%p17) target = $region8
    $region5: #{tpu_custom_call.1} parent=1 // loop_body
      %s21 = ssub.s32 %s16, 1
      %s22 = ssub.s32 %s16, 2
      %s29 = sadd.s32 1, %s24
      %p30 = scmp.ge.s32.totalorder %s29, 2
      %s31 = scalar_select %p30, 0, %s29
      %s32 = sadd.s32 1, %s23
      %s33 = scalar_select %p30, %s32, %s23
      %p34 = scmp.ge.s32.totalorder %s33, 1
      %s35 = scalar_select %p34, 0, %s33
      %s36 = ssub.s32 %s24, %s31
      %s37 = ssub.s32 %s23, %s35
      %s38 = sor.u32 %s36, %s37
      %p39 = scmp.eq.s32.totalorder %s38, 0
      %s41 = sadd.s32 %s40, 1
      %s42 = scalar_select %p39, %s40, %s41
      %p45 = pneg %p39
      %p46 = scmp.eq.s32.totalorder %s16, 1
      %p47 = por %p45, %p46
      %p48 = scmp.ne.s32.totalorder %s40, %s43
      %p49 = scmp.eq.s32.totalorder %s16, 0
      %p50 = por %p48, %p49
      %p51 = scmp.ne.s32.totalorder %s40, %s43
      %p52 = scmp.eq.s32.totalorder %s21, 1
      %p53 = por %p51, %p52
      %p54 = scmp.ne.s32.totalorder %s43, %s44
      %p55 = scmp.eq.s32.totalorder %s21, 0
      %p56 = por %p54, %p55
      %p57 = scmp.ne.s32.totalorder %s43, %s44
      %p58 = scmp.eq.s32.totalorder %s22, 1
      %p59 = por %p57, %p58
      %p61 = scmp.ne.s32.totalorder %s44, %s60
      %p62 = scmp.eq.s32.totalorder %s22, 0
      %p63 = por %p61, %p62
      %s65 = sadd.s32 %s64, 1
      %p68 = scmp.eq.s32.totalorder %s16, 1
      %p69 = scmp.ne.s32.totalorder %s64, %s66
      %p70 = scmp.eq.s32.totalorder %s16, 0
      %p71 = por %p69, %p70
      %p72 = scmp.ne.s32.totalorder %s64, %s66
      %p73 = scmp.eq.s32.totalorder %s21, 1
      %p74 = por %p72, %p73
      %p75 = scmp.ne.s32.totalorder %s66, %s67
      %p76 = scmp.eq.s32.totalorder %s21, 0
      %p77 = por %p75, %p76
      %p78 = scmp.ne.s32.totalorder %s66, %s67
      %p79 = scmp.eq.s32.totalorder %s22, 1
      %p80 = por %p78, %p79
      %p82 = scmp.ne.s32.totalorder %s67, %s81
      %p83 = scmp.eq.s32.totalorder %s22, 0
      %p84 = por %p82, %p83
      %s85 = ssub.s32 %s23, %s35
      %p86 = scmp.eq.s32.totalorder %s85, 0
      %s88 = sadd.s32 %s87, 1
      %s89 = scalar_select %p86, %s87, %s88
      %p92 = pneg %p86
      %p93 = scmp.eq.s32.totalorder %s16, 1
      %p94 = por %p92, %p93
      %p95 = scmp.ne.s32.totalorder %s87, %s90
      %p96 = scmp.eq.s32.totalorder %s16, 0
      %p97 = por %p95, %p96
      %p98 = scmp.ne.s32.totalorder %s87, %s90
      %p99 = scmp.eq.s32.totalorder %s21, 1
      %p100 = por %p98, %p99
      %p101 = scmp.ne.s32.totalorder %s90, %s91
      %p102 = scmp.eq.s32.totalorder %s21, 0
      %p103 = por %p101, %p102
      %p104 = scmp.ne.s32.totalorder %s90, %s91
      %p105 = scmp.eq.s32.totalorder %s22, 1
      %p106 = por %p104, %p105
      %p108 = scmp.ne.s32.totalorder %s91, %s107
      %p109 = scmp.eq.s32.totalorder %s22, 0
      %p110 = por %p108, %p109
      %s111 = ssub.s32 %s24, %s31
      %s112 = ssub.s32 %s23, %s35
      %s113 = sor.u32 %s111, %s112
      %p114 = scmp.eq.s32.totalorder %s113, 0
      %s116 = sadd.s32 %s115, 1
      %s117 = scalar_select %p114, %s115, %s116
      %p120 = pneg %p114
      %p121 = scmp.eq.s32.totalorder %s16, 1
      %p122 = por %p120, %p121
      %p123 = scmp.ne.s32.totalorder %s115, %s118
      %p124 = scmp.eq.s32.totalorder %s16, 0
      %p125 = por %p123, %p124
      %p126 = scmp.ne.s32.totalorder %s115, %s118
      %p127 = scmp.eq.s32.totalorder %s21, 1
      %p128 = por %p126, %p127
      %p129 = scmp.ne.s32.totalorder %s118, %s119
      %p130 = scmp.eq.s32.totalorder %s21, 0
      %p131 = por %p129, %p130
      %p132 = scmp.ne.s32.totalorder %s118, %s119
      %p133 = scmp.eq.s32.totalorder %s22, 1
      %p134 = por %p132, %p133
      %p136 = scmp.ne.s32.totalorder %s119, %s135
      %p137 = scmp.eq.s32.totalorder %s22, 0
      %p138 = por %p136, %p137
      %p139 = scmp.le.s32.totalorder 1, %s16
      %p140 = scmp.lt.s32.totalorder %s16, 3
      %p141 = pnand %p139, %p140
      %p142 = pneg %p141
      // Predicated region
      $region9: #{tpu_custom_call.1} parent=5 // pred_check
        _
      $region10: #{tpu_custom_call.1} parent=5 // pred_check_branch
        %144 = sbr.rel (%p141) target = $region12
      $region11: #{tpu_custom_call.1} parent=5 // pred_region
        %s145 = ssub.s32 %s16, 1
        // Predicated region
        $region13: #{tpu_custom_call.1} parent=11 // pred_check
          %p146 = pneg %p77
        $region14: #{tpu_custom_call.1} parent=11 // pred_check_branch
          %148 = sbr.rel (%p146) target = $region16
        $region15: #{tpu_custom_call.1} parent=11 // pred_region
          %s150 = ssub.s32 384, 384
          %151 = vsyncadd [#allocation6], %s150
          %s152 = sshll.u32 [#allocation5], 4
          %s153 = int_to_ptr.vmem [resolvable:$true] %s152
          %158 = dma.hbm_to_vmem [thread:$0]  %s1, 384, %s153, [#allocation6], 64, 64, 4
        $region16: #{tpu_custom_call.1} parent=11 // pred_fallthru
          _
        // Predicated region
        $region17: #{tpu_custom_call.1} parent=11 // pred_check
          %p159 = pneg %p103
        $region18: #{tpu_custom_call.1} parent=11 // pred_check_branch
          %161 = sbr.rel (%p159) target = $region20
        $region19: #{tpu_custom_call.1} parent=11 // pred_region
          %s162 = smul.u32 2, %s25
          %s164 = ssub.s32 256, 256
          %165 = vsyncadd [#allocation6], %s164
          %s166 = smul.addr %s162, 128
          %s167 = scalar_lea.hbm %s2, %s166
          %s168 = sshll.u32 [#allocation7], 4
          %s169 = int_to_ptr.vmem [resolvable:$true] %s168
          %174 = dma.hbm_to_vmem [thread:$0]  %s167, 256, %s169, [#allocation6], 128, 128, 8
        $region20: #{tpu_custom_call.1} parent=11 // pred_fallthru
          _
      $region12: #{tpu_custom_call.1} parent=5 // pred_fallthru
        _
      %p175 = scmp.lt.s32.totalorder %s16, 2
      // Predicated region
      $region21: #{tpu_custom_call.1} parent=5 // pred_check
        %p176 = pneg %p175
      $region22: #{tpu_custom_call.1} parent=5 // pred_check_branch
        %178 = sbr.rel (%p176) target = $region24
      $region23: #{tpu_custom_call.1} parent=5 // pred_region
        // Predicated region
        $region25: #{tpu_custom_call.1} parent=23 // pred_check
          %p179 = pneg %p50
        $region26: #{tpu_custom_call.1} parent=23 // pred_check_branch
          %181 = sbr.rel (%p179) target = $region28
        $region27: #{tpu_custom_call.1} parent=23 // pred_region
          %s182 = sand.u32 %s40, 1
          %s183 = scalar_lea.sflag [#allocation3], %s182
          %s184 = sand.u32 %s40, 1
          %s185 = smul.addr %s184, 8
          %s186 = scalar_lea.vmem [#allocation2], %s185
          %s187 = smul.u32 2, %s23
          %s189 = ssub.s32 128, 128
          %190 = vsyncadd %s183, %s189
          %s191 = smul.addr %s24, 2
          %s192 = sadd.s32 %s187, %s191
          %s193 = smul.addr %s192, 64
          %s194 = scalar_lea.hbm %s0, %s193
          %s195 = sshll.u32 %s186, 4
          %s196 = int_to_ptr.vmem [resolvable:$true] %s195
          %201 = dma.hbm_to_vmem [thread:$0]  %s194, 128, %s196, %s183, 64, 64, 4
        $region28: #{tpu_custom_call.1} parent=23 // pred_fallthru
          _
      $region24: #{tpu_custom_call.1} parent=5 // pred_fallthru
        _
      %p202 = scmp.le.s32.totalorder 1, %s16
      %p203 = scmp.lt.s32.totalorder %s16, 3
      %p204 = pnand %p202, %p203
      %p205 = pneg %p204
      // Predicated region
      $region29: #{tpu_custom_call.1} parent=5 // pred_check
        _
      $region30: #{tpu_custom_call.1} parent=5 // pred_check_branch
        %207 = sbr.rel (%p204) target = $region32
      $region31: #{tpu_custom_call.1} parent=5 // pred_region
        %s208 = ssub.s32 %s16, 1
        %s209 = sand.u32 %s43, 1
        %s210 = scalar_lea.sflag [#allocation3], %s209
        %s211 = sand.u32 %s43, 1
        %s212 = smul.addr %s211, 8
        %s213 = scalar_lea.vmem [#allocation2], %s212
        // Predicated region
        $region33: #{tpu_custom_call.1} parent=31 // pred_check
          %p214 = pneg %p56
        $region34: #{tpu_custom_call.1} parent=31 // pred_check_branch
          %216 = sbr.rel (%p214) target = $region36
        $region35: #{tpu_custom_call.1} parent=31 // pred_region
          %217 = dma.done %s210, 128
        $region36: #{tpu_custom_call.1} parent=31 // pred_fallthru
          _
        // Predicated region
        $region37: #{tpu_custom_call.1} parent=31 // pred_check
          %p218 = pneg %p77
        $region38: #{tpu_custom_call.1} parent=31 // pred_check_branch
          %220 = sbr.rel (%p218) target = $region40
        $region39: #{tpu_custom_call.1} parent=31 // pred_region
          %221 = dma.done [#allocation6], 384
        $region40: #{tpu_custom_call.1} parent=31 // pred_fallthru
          _
        // Predicated region
        $region41: #{tpu_custom_call.1} parent=31 // pred_check
          %p222 = pneg %p103
        $region42: #{tpu_custom_call.1} parent=31 // pred_check_branch
          %224 = sbr.rel (%p222) target = $region44
        $region43: #{tpu_custom_call.1} parent=31 // pred_region
          %225 = dma.done [#allocation6], 256
        $region44: #{tpu_custom_call.1} parent=31 // pred_fallthru
          _
        %s226 = sand.u32 %s43, 1
        %s227 = scalar_lea.sflag [#allocation3], %s226
        %s228 = sand.u32 %s43, 1
        %s229 = smul.addr %s228, 8
        %s230 = scalar_lea.vmem [#allocation2], %s229
        %p231 = pneg %p56
        %p232 = pneg %p53
        %p233 = pneg %p77
        %p234 = pneg %p74
        %p235 = pneg %p103
        %p236 = pneg %p100
        %p237 = pneg %p131
        %p238 = pneg %p128
        %s239 = sand.u32 %s118, 1
        %s240 = scalar_lea.sflag [#allocation4], %s239
        %s241 = sand.u32 %s118, 1
        %s242 = smul.addr %s241, 16
        %s243 = scalar_lea.vmem [#allocation8], %s242
        %s244 = smul.u32 2, %s25
        %s245 = smul.u32 2, %s25
        %s246 = smul.u32 2, %s25
        %v248 = vld [vmem:[%s213] sm:$0xf]
        %v249 = vld [vmem:[%s213 + $0x4] sm:$0xf]
        %v250 = vld [vmem:[#allocation5] sm:$0xf]
        %v251 = vld [vmem:[#allocation5 + $0x4] sm:$0xf]
        %v252 = vld [vmem:[#allocation5 + $0x8] sm:$0xf]
        %v253 = vld [vmem:[#allocation5 + $0xc] sm:$0xf]
        %v254 = vld [vmem:[#allocation5 + $0x10] sm:$0xf]
        %v255 = vld [vmem:[#allocation5 + $0x14] sm:$0xf]
        %v256 = vld [vmem:[#allocation7] sm:$0xff]
        %v257 = vld [vmem:[#allocation7 + $0x8] sm:$0xff]
        %v260 = vunpack.c.l.b16 %v248
        %v261 = vunpack.c.l.b16 %v249
        %v262 = vpack.c.b16 %v261, %v260
        %v269 = vunpack.c.l.b16 %v250
        %v270 = vunpack.c.l.b16 %v251
        %v271 = vunpack.c.l.b16 %v252
        %v272 = vunpack.c.l.b16 %v253
        %v273 = vunpack.c.l.b16 %v254
        %v274 = vunpack.c.l.b16 %v255
        %v275 = vpack.c.b16 %v270, %v269
        %v276 = vpack.c.b16 %v272, %v271
        %v277 = vpack.c.b16 %v274, %v273
        %vm281 = vcmask 392192
        %v283 = vsel %vm281, %v262, 0
        %285 = vmatprep.subr.bf16.mxu0 0
        %286 = vmatpush1.bf16.msra.mxu0 %v275
        %287 = vmatprep.subr.bf16.mxu0 0
        %288 = vmatpush1.bf16.msra.mxu0 %v276
        %289 = vmatprep.subr.bf16.mxu0 0
        %290 = vmatpush1.bf16.msra.mxu0 %v277
        %291 = vmatprep.subr.bf16.mxu0 0
        %292 = vmatpush1.bf16.msra.mxu0 0
        %293 = vmatprep.subr.bf16.mxu0 0
        %294 = vmatpush1.bf16.msra.mxu0 0
        %295 = vmatprep.subr.bf16.mxu0 0
        %296 = vmatpush1.bf16.msra.mxu0 0
        %297 = vmatprep.subr.bf16.mxu0 0
        %298 = vmatpush1.bf16.msra.mxu0 0
        %299 = vmatprep.subr.bf16.mxu0 0
        %300 = vmatpush1.bf16.msra.mxu0 0
        %301 = vmatprep.subr.bf16.mxu0 0
        %302 = vmatpush1.bf16.msra.mxu0 0
        %303 = vmatprep.subr.bf16.mxu0 0
        %304 = vmatpush1.bf16.msra.mxu0 0
        %305 = vmatprep.subr.bf16.mxu0 0
        %306 = vmatpush1.bf16.msra.mxu0 0
        %307 = vmatprep.subr.bf16.mxu0 0
        %308 = vmatpush1.bf16.msra.mxu0 0
        %309 = vmatprep.subr.bf16.mxu0 0
        %310 = vmatpush1.bf16.msra.mxu0 0
        %311 = vmatprep.subr.bf16.mxu0 0
        %312 = vmatpush1.bf16.msra.mxu0 0
        %313 = vmatprep.subr.bf16.mxu0 0
        %314 = vmatpush1.bf16.msra.mxu0 0
        %315 = vmatprep.subr.bf16.mxu0 0
        %316 = vmatpush1.bf16.msra.mxu0 0
        %317 = vmatprep.mubr.bf16.mxu0 0
        %318 = vmatmul.mubr.bf16.gmra.mrb[0].mxu0 %v283
        %v319 = vpop.f32.mrb[0].mxu0
        %v320 = vadd.f32 %v256, %v319
        %v321 = vpop.f32.mrb[0].mxu0
        %v322 = vpop.f32.mrb[0].mxu0
        %v323 = vadd.f32 %v257, %v322
        %v324 = vpop.f32.mrb[0].mxu0
        %325 = vdwg.mxu0
        %326 = vst [vmem:[%s243] sm:$0xff] %v320
        %327 = vst [vmem:[%s243 + $0x8] sm:$0xff] %v323
        %s328 = sand.u32 %s118, 1
        %s329 = scalar_lea.sflag [#allocation4], %s328
        %s330 = sand.u32 %s118, 1
        %s331 = smul.addr %s330, 16
        %s332 = scalar_lea.vmem [#allocation8], %s331
        // Predicated region
        $region45: #{tpu_custom_call.1} parent=31 // pred_check
          %p333 = pneg %p128
        $region46: #{tpu_custom_call.1} parent=31 // pred_check_branch
          %335 = sbr.rel (%p333) target = $region48
        $region47: #{tpu_custom_call.1} parent=31 // pred_region
          %s336 = smul.u32 2, %s25
          %s338 = ssub.s32 256, 256
          %339 = vsyncadd %s329, %s338
          %s340 = smul.addr %s26, 2
          %s341 = sadd.s32 %s336, %s340
          %s342 = smul.addr %s341, 128
          %s343 = scalar_lea.hbm %s3, %s342
          %s344 = sshll.u32 %s332, 4
          %s345 = int_to_ptr.vmem [resolvable:$true] %s344
          %350 = dma.vmem_to_hbm [thread:$0]  %s345, 256, %s343, %s329, 128, 128, 8
        $region48: #{tpu_custom_call.1} parent=31 // pred_fallthru
          _
      $region32: #{tpu_custom_call.1} parent=5 // pred_fallthru
        _
      %p351 = scmp.le.s32.totalorder 2, %s16
      // Predicated region
      $region49: #{tpu_custom_call.1} parent=5 // pred_check
        %p352 = pneg %p351
      $region50: #{tpu_custom_call.1} parent=5 // pred_check_branch
        %354 = sbr.rel (%p352) target = $region52
      $region51: #{tpu_custom_call.1} parent=5 // pred_region
        %s355 = ssub.s32 %s16, 2
        // Predicated region
        $region53: #{tpu_custom_call.1} parent=51 // pred_check
          %p356 = pneg %p134
        $region54: #{tpu_custom_call.1} parent=51 // pred_check_branch
          %358 = sbr.rel (%p356) target = $region56
        $region55: #{tpu_custom_call.1} parent=51 // pred_region
          %s359 = sand.u32 %s119, 1
          %s360 = scalar_lea.sflag [#allocation4], %s359
          %s361 = sand.u32 %s119, 1
          %s362 = smul.addr %s361, 16
          %s363 = scalar_lea.vmem [#allocation8], %s362
          %364 = dma.done %s360, 256
        $region56: #{tpu_custom_call.1} parent=51 // pred_fallthru
          _
      $region52: #{tpu_custom_call.1} parent=5 // pred_fallthru
        _
    $region6: #{tpu_custom_call.1} parent=1 // loop_footer
      %s20 = sadd.s32 1, %s16
    $region7: #{tpu_custom_call.1} parent=1 // loop_footer_branch
      %15 = sbr.rel target = $region3
    $region8: #{tpu_custom_call.1} parent=1 // loop_exit
      _
    %365 = vsyncpa [#allocation3], 1
    %s366 = scalar_lea.sflag [#allocation3], 1
    %367 = vsyncpa %s366, 1
    %368 = vsyncpa [#allocation6], 1
    %369 = vsyncpa [#allocation4], 1
    %s370 = scalar_lea.sflag [#allocation4], 1
    %371 = vsyncpa %s370, 1

</llo_original>
